<compile_context>
chip_gen: v5e
topology: v5e:2x2
jax: 0.10.0
libtpu: 0.0.40
codegen_flags: <defaults>
</compile_context>

<pallas_src>
import jax
import jax.numpy as jnp
from jax.experimental import pallas as pl
from jax.experimental.pallas import tpu as pltpu

_MiB = 1024 * 1024


def _vmem_capacity_bytes(default=64 * _MiB):
    """Physical VMEM per TensorCore; conservative fallback if unqueryable."""
    try:
        info = pltpu.get_tpu_info()
        for attr in ("vmem_capacity_bytes", "vmem_size_bytes", "vmem_bytes"):
            v = getattr(info, attr, None)
            if v:
                return int(v)
    except Exception:
        pass
    return default


def _choose_rows(num_rows, lanes, c, itemsize, budget_bytes):
    """Largest row-tile tr (tr | num_rows and tr % 8 == 0, or tr == num_rows)
    whose double-buffered input footprint fits budget_bytes.

    Footprint: 2 inputs x 2 pipeline buffers x (c * tr_pad * lane_pad bytes),
    with sublane padding from the dtype packing (8 rows f32, 16 bf16, 32 int8)
    and lanes padded to a multiple of 128.
    """
    sub = max(8, 32 // max(1, itemsize))
    lane_pad = -(-lanes // 128) * 128
    cands = sorted(set(
        [d for d in range(8, num_rows + 1, 8) if num_rows % d == 0]
        + [num_rows]))
    best = None
    for t in cands:                      # ascending; keep the largest that fits
        t_pad = -(-t // sub) * sub
        per_buf = c * t_pad * lane_pad * itemsize
        if 2 * 2 * per_buf <= budget_bytes:
            best = t
    if best is None:
        # Even the smallest legal tile exceeds the budget; take it and rely on
        # the explicitly raised vmem_limit_bytes.
        best = cands[0]
    return best


def _make_kernel(c, tr, lanes):
    fold = (tr % 8 == 0)

    def kernel(x_ref, y_ref, s_ref, q_ref):
        # x_ref, y_ref: (c, tr, lanes); s_ref, q_ref: (PR, lanes) f32 partials.
        x = x_ref[...].astype(jnp.float32)
        y = y_ref[...].astype(jnp.float32)
        d = x - y
        # Channel reduce over the leading axis -> cheap VPU adds: (tr, lanes).
        # 1/c scaling is deferred to the wrapper finalize.
        d2 = jnp.sum(d * d, axis=0)
        sq = d2 * d2
        if fold:
            # Fold rows into an (8, lanes) vector partial: elementwise vreg adds.
            s_ref[...] = jnp.sum(d2.reshape(tr // 8, 8, lanes), axis=0)
            q_ref[...] = jnp.sum(sq.reshape(tr // 8, 8, lanes), axis=0)
        else:
            s_ref[...] = d2
            q_ref[...] = sq

    return kernel


def std_loss(img1, img2):
    """img1, img2: (b, c, m, n) float arrays. Returns scalar f32 StdLoss."""
    assert img1.shape == img2.shape
    b, c, m, n = img1.shape
    n_pix = m * n
    itemsize = jnp.dtype(img1.dtype).itemsize

    # Lane-dense spatial layout when possible (free contiguous reshape in HBM).
    if n_pix % 128 == 0:
        lanes = 128
        rows = n_pix // 128
    else:
        lanes = n
        rows = m
    x = img1.reshape(b, c, rows, lanes)
    y = img2.reshape(b, c, rows, lanes)

    # Per-generation VMEM budgets (v5e/v6e: 128 MiB physical, v7x: 64 MiB).
    phys = _vmem_capacity_bytes()
    vmem_limit = min(phys * 3 // 4, 96 * _MiB)
    input_budget = min(int(phys * 0.35), 48 * _MiB)

    tr = _choose_rows(rows, lanes, c, itemsize, input_budget)
    nt = rows // tr
    pr = 8 if tr % 8 == 0 else tr

    kernel = _make_kernel(c, tr, lanes)

    in_spec = pl.BlockSpec((None, c, tr, lanes), lambda i, j: (i, 0, j, 0))
    out_spec = pl.BlockSpec((None, None, pr, lanes), lambda i, j: (i, j, 0, 0))
    # TODO(synk): for tiny tiles (< ~1 MiB per buffer) pipeline_mode=
    # pl.Buffered(3) on the input specs would further hide DMA-issue latency;
    # default double-buffering is kept here.

    s_part, q_part = pl.pallas_call(
        kernel,
        out_shape=(
            jax.ShapeDtypeStruct((b, nt, pr, lanes), jnp.float32),
            jax.ShapeDtypeStruct((b, nt, pr, lanes), jnp.float32),
        ),
        grid_spec=pltpu.PrefetchScalarGridSpec(
            num_scalar_prefetch=0,
            grid=(b, nt),
            in_specs=[in_spec, in_spec],
            out_specs=[out_spec, out_spec],
        ),
        compiler_params=pltpu.CompilerParams(
            # Per-chunk partial outputs make both grid axes independent, so
            # both TensorCores (v7x) share HBM bandwidth even at batch 1.
            dimension_semantics=("parallel", "parallel"),
            vmem_limit_bytes=vmem_limit,
        ),
    )(x, y)

    # Finalize on a handful of floats: deferred 1/c scaling, unbiased variance,
    # clamp against f32 cancellation, sqrt, batch mean.
    inv_c = 1.0 / float(c)
    s = jnp.sum(s_part, axis=(1, 2, 3)) * inv_c
    q = jnp.sum(q_part, axis=(1, 2, 3)) * (inv_c * inv_c)
    n_f = float(n_pix)
    var = (q - s * s * (1.0 / n_f)) * (1.0 / (n_f - 1.0))
    var = jnp.maximum(var, 0.0)  # guard tiny negative from rounding -> NaN sqrt
    # TODO(synk): for very large / ill-conditioned images, shift by a first-chunk
    # mean (two-pass) to avoid cancellation in q - s^2/N.
    return jnp.mean(jnp.sqrt(var))


def _std_loss_ref(img1, img2):
    b = img1.shape[0]
    r = jnp.mean(jnp.square(img1 - img2), axis=1).reshape(b, -1)
    std = jnp.std(r, axis=-1, ddof=1)  # torch.std default is unbiased
    return jnp.mean(std)


if __name__ == "__main__":
    key = jax.random.PRNGKey(0)
    k1, k2 = jax.random.split(key)
    b, c, m, n = 2, 4, 16, 16
    img1 = jax.random.normal(k1, (b, c, m, n), dtype=jnp.float32)
    img2 = jax.random.normal(k2, (b, c, m, n), dtype=jnp.float32)

    out = std_loss(img1, img2)
    out = jax.block_until_ready(out)

    ref = _std_loss_ref(img1, img2)
    assert jnp.allclose(out, ref, rtol=1e-4, atol=1e-6), (out, ref)

    print("KERNEL_OK")
</pallas_src>

<mosaic_0001>
module attributes {stable_mosaic.version = 11 : i64} {
  func.func @kernel(%arg0: i32, %arg1: i32, %arg2: memref<1x4x2x128xf32, #tpu.memory_space<vmem>>, %arg3: memref<1x4x2x128xf32, #tpu.memory_space<vmem>>, %arg4: memref<1x1x2x128xf32, #tpu.memory_space<vmem>>, %arg5: memref<1x1x2x128xf32, #tpu.memory_space<vmem>>) attributes {dimension_semantics = [#tpu.dimension_semantics<parallel>, #tpu.dimension_semantics<parallel>], iteration_bounds = array<i64: 2, 1>, scalar_prefetch = 0 : i64, scratch_operands = 0 : i64, tpu.core_type = #tpu.core_type<tc>, window_params = [{transform_indices = @transform_0, window_bounds = array<i64: 1, 4, 2, 128>}, {transform_indices = @transform_1, window_bounds = array<i64: 1, 4, 2, 128>}, {transform_indices = @transform_2, window_bounds = array<i64: 1, 1, 2, 128>}, {transform_indices = @transform_3, window_bounds = array<i64: 1, 1, 2, 128>}]} {
    %c0 = arith.constant 0 : index
    %c0_0 = arith.constant 0 : index
    %c0_1 = arith.constant 0 : index
    %c0_2 = arith.constant 0 : index
    %0 = vector.load %arg2[%c0, %c0_0, %c0_1, %c0_2] : memref<1x4x2x128xf32, #tpu.memory_space<vmem>>, vector<1x4x2x128xf32>
    %1 = vector.shape_cast %0 : vector<1x4x2x128xf32> to vector<4x2x128xf32>
    %c0_3 = arith.constant 0 : index
    %c0_4 = arith.constant 0 : index
    %c0_5 = arith.constant 0 : index
    %c0_6 = arith.constant 0 : index
    %2 = vector.load %arg3[%c0_3, %c0_4, %c0_5, %c0_6] : memref<1x4x2x128xf32, #tpu.memory_space<vmem>>, vector<1x4x2x128xf32>
    %3 = vector.shape_cast %2 : vector<1x4x2x128xf32> to vector<4x2x128xf32>
    %4 = arith.subf %1, %3 : vector<4x2x128xf32>
    %5 = arith.mulf %4, %4 : vector<4x2x128xf32>
    %cst = arith.constant dense<0.000000e+00> : vector<2x128xf32>
    %6 = vector.multi_reduction <add>, %5, %cst [0] : vector<4x2x128xf32> to vector<2x128xf32>
    %7 = arith.mulf %6, %6 : vector<2x128xf32>
    %c0_7 = arith.constant 0 : index
    %c0_8 = arith.constant 0 : index
    %c0_9 = arith.constant 0 : index
    %c0_10 = arith.constant 0 : index
    %8 = vector.load %arg4[%c0_7, %c0_8, %c0_9, %c0_10] : memref<1x1x2x128xf32, #tpu.memory_space<vmem>>, vector<1x1x2x128xf32>
    %9 = vector.shape_cast %8 : vector<1x1x2x128xf32> to vector<2x128xf32>
    %10 = vector.shape_cast %6 : vector<2x128xf32> to vector<1x1x2x128xf32>
    tpu.vector_store %arg4[%c0_7, %c0_8, %c0_9, %c0_10], %10 {strides = array<i32>} : memref<1x1x2x128xf32, #tpu.memory_space<vmem>>, vector<1x1x2x128xf32>,
    %c0_11 = arith.constant 0 : index
    %c0_12 = arith.constant 0 : index
    %c0_13 = arith.constant 0 : index
    %c0_14 = arith.constant 0 : index
    %11 = vector.load %arg5[%c0_11, %c0_12, %c0_13, %c0_14] : memref<1x1x2x128xf32, #tpu.memory_space<vmem>>, vector<1x1x2x128xf32>
    %12 = vector.shape_cast %11 : vector<1x1x2x128xf32> to vector<2x128xf32>
    %13 = vector.shape_cast %7 : vector<2x128xf32> to vector<1x1x2x128xf32>
    tpu.vector_store %arg5[%c0_11, %c0_12, %c0_13, %c0_14], %13 {strides = array<i32>} : memref<1x1x2x128xf32, #tpu.memory_space<vmem>>, vector<1x1x2x128xf32>,
    return
  }
  func.func @transform_0(%arg0: i32, %arg1: i32) -> (i32, i32, i32, i32) {
    %c0_i32 = arith.constant 0 : i32
    %c0_i32_0 = arith.constant 0 : i32
    %c0_i32_1 = arith.constant 0 : i32
    return %arg0, %c0_i32, %arg1, %c0_i32_0 : i32, i32, i32, i32
  }
  func.func @transform_1(%arg0: i32, %arg1: i32) -> (i32, i32, i32, i32) {
    %c0_i32 = arith.constant 0 : i32
    %c0_i32_0 = arith.constant 0 : i32
    %c0_i32_1 = arith.constant 0 : i32
    return %arg0, %c0_i32, %arg1, %c0_i32_0 : i32, i32, i32, i32
  }
  func.func @transform_2(%arg0: i32, %arg1: i32) -> (i32, i32, i32, i32) {
    %c0_i32 = arith.constant 0 : i32
    %c0_i32_0 = arith.constant 0 : i32
    %c0_i32_1 = arith.constant 0 : i32
    return %arg0, %arg1, %c0_i32, %c0_i32_0 : i32, i32, i32, i32
  }
  func.func @transform_3(%arg0: i32, %arg1: i32) -> (i32, i32, i32, i32) {
    %c0_i32 = arith.constant 0 : i32
    %c0_i32_0 = arith.constant 0 : i32
    %c0_i32_1 = arith.constant 0 : i32
    return %arg0, %arg1, %c0_i32, %c0_i32_0 : i32, i32, i32, i32
  }
}

</mosaic_0001>

<llo_original>
// kernel: tpu_custom_call.1
$region0: #{tpu_custom_call.1}
  #allocation0 [shape = 'u32[]', space=smem, size = 0x4, offset = 0x4, fixed_abs, tag = 'smem constant byte address 0x4 - core index']
  #allocation1 [shape = 'u32[72,128]{1,0:T(1,128)}', space=vmem, size = 0x9000, scoped, tag = 'internal scratch']
  %s0 = inlined_call_operand.hbm [shape: f32[2,4,2,128], index: 0, kind: input, shape index: {}]
  %s1 = inlined_call_operand.hbm [shape: f32[2,4,2,128], index: 1, kind: input, shape index: {}]
  %s2 = inlined_call_operand.hbm [shape: f32[2,1,2,128], index: 2, kind: output, shape index: {0}]
  %s3 = inlined_call_operand.hbm [shape: f32[2,1,2,128], index: 3, kind: output, shape index: {1}]
  %4 = xla_tuple %s2, %s3
  %s5 = sld [smem:[#allocation0]]
  $region57: #{tpu_custom_call.1} parent=0
    _
  %s7 = ssub.s32 1, %s5
  %s8 = scalar_select 0, %s7, %s5
  $region1: #{tpu_custom_call.1} parent=0
    #allocation2 [shape = 'u8[8192]{0}', space=vmem, size = 0x2000, scoped, tag = 'input window, operand 0']
    #allocation3 [shape = 's32[2]{0}', space=sflag, size = 0x8, scoped, tag = 'scoped memory for tpu_custom_call.1']
    #allocation4 [shape = 's32[2]{0}', space=sflag, size = 0x8, scoped, tag = 'scoped memory for tpu_custom_call.1']
    #allocation5 [shape = 'u8[8192]{0}', space=vmem, size = 0x2000, scoped, tag = 'input window, operand 1']
    #allocation6 [shape = 's32[2]{0}', space=sflag, size = 0x8, scoped, tag = 'scoped memory for tpu_custom_call.1']
    #allocation7 [shape = 'u8[2048]{0}', space=vmem, size = 0x800, scoped, tag = 'output window, operand 0']
    #allocation8 [shape = 'u8[2048]{0}', space=vmem, size = 0x800, scoped, tag = 'output window, operand 1']
    #allocation9 [shape = 's32[2]{0}', space=sflag, size = 0x8, scoped, tag = 'scoped memory for tpu_custom_call.1']
    %9 = vsyncpa [#allocation3], 0
    %s10 = scalar_lea.sflag [#allocation3], 1
    %11 = vsyncpa %s10, 0
    %12 = vsyncpa [#allocation6], 0
    %s13 = scalar_lea.sflag [#allocation6], 1
    %14 = vsyncpa %s13, 0
    %15 = vsyncpa [#allocation4], 0
    %s16 = scalar_lea.sflag [#allocation4], 1
    %17 = vsyncpa %s16, 0
    %18 = vsyncpa [#allocation9], 0
    %s19 = scalar_lea.sflag [#allocation9], 1
    %20 = vsyncpa %s19, 0
    loop: start=0, step=1, limit=4
    $region2: #{tpu_custom_call.1} parent=1 // loop_pre_header
      _
    $region3: #{tpu_custom_call.1} parent=1 // loop_header
      %s22 = sphi 0, %s26
      %p23 = scmp.ge.s32.totalorder %s22, 4
      %s29 = sphi 0, %s41
      %s30 = sphi 0, %s37
      %s31 = sphi 0, %s29
      %s32 = sphi 0, %s30
      %s33 = sphi 0, %s31
      %s34 = sphi 0, %s32
      %s46 = sphi 0, %s48
      %s49 = sphi 0, %s46
      %s50 = sphi 0, %s49
      %s66 = sphi 0, %s50
      %s74 = sphi 0, %s76
      %s77 = sphi 0, %s74
      %s78 = sphi 0, %s77
      %s94 = sphi 0, %s78
      %s102 = sphi 0, %s104
      %s105 = sphi 0, %s102
      %s106 = sphi 0, %s105
      %s122 = sphi 0, %s106
      %s130 = sphi 0, %s132
      %s133 = sphi 0, %s130
      %s134 = sphi 0, %s133
      %s150 = sphi 0, %s134
    $region4: #{tpu_custom_call.1} parent=1 // loop_header_branch
      %25 = sbr.rel (%p23) target = $region8
    $region5: #{tpu_custom_call.1} parent=1 // loop_body
      %s27 = ssub.s32 %s22, 1
      %s28 = ssub.s32 %s22, 2
      %s35 = sadd.s32 1, %s30
      %p36 = scmp.ge.s32.totalorder %s35, 1
      %s37 = scalar_select %p36, 0, %s35
      %s38 = sadd.s32 1, %s29
      %s39 = scalar_select %p36, %s38, %s29
      %p40 = scmp.ge.s32.totalorder %s39, 2
      %s41 = scalar_select %p40, 0, %s39
      %s42 = ssub.s32 %s29, %s41
      %s43 = ssub.s32 %s30, %s37
      %s44 = sor.u32 %s42, %s43
      %p45 = scmp.eq.s32.totalorder %s44, 0
      %s47 = sadd.s32 %s46, 1
      %s48 = scalar_select %p45, %s46, %s47
      %p51 = pneg %p45
      %p52 = scmp.eq.s32.totalorder %s22, 1
      %p53 = por %p51, %p52
      %p54 = scmp.ne.s32.totalorder %s46, %s49
      %p55 = scmp.eq.s32.totalorder %s22, 0
      %p56 = por %p54, %p55
      %p57 = scmp.ne.s32.totalorder %s46, %s49
      %p58 = scmp.eq.s32.totalorder %s27, 1
      %p59 = por %p57, %p58
      %p60 = scmp.ne.s32.totalorder %s49, %s50
      %p61 = scmp.eq.s32.totalorder %s27, 0
      %p62 = por %p60, %p61
      %p63 = scmp.ne.s32.totalorder %s49, %s50
      %p64 = scmp.eq.s32.totalorder %s28, 1
      %p65 = por %p63, %p64
      %p67 = scmp.ne.s32.totalorder %s50, %s66
      %p68 = scmp.eq.s32.totalorder %s28, 0
      %p69 = por %p67, %p68
      %s70 = ssub.s32 %s29, %s41
      %s71 = ssub.s32 %s30, %s37
      %s72 = sor.u32 %s70, %s71
      %p73 = scmp.eq.s32.totalorder %s72, 0
      %s75 = sadd.s32 %s74, 1
      %s76 = scalar_select %p73, %s74, %s75
      %p79 = pneg %p73
      %p80 = scmp.eq.s32.totalorder %s22, 1
      %p81 = por %p79, %p80
      %p82 = scmp.ne.s32.totalorder %s74, %s77
      %p83 = scmp.eq.s32.totalorder %s22, 0
      %p84 = por %p82, %p83
      %p85 = scmp.ne.s32.totalorder %s74, %s77
      %p86 = scmp.eq.s32.totalorder %s27, 1
      %p87 = por %p85, %p86
      %p88 = scmp.ne.s32.totalorder %s77, %s78
      %p89 = scmp.eq.s32.totalorder %s27, 0
      %p90 = por %p88, %p89
      %p91 = scmp.ne.s32.totalorder %s77, %s78
      %p92 = scmp.eq.s32.totalorder %s28, 1
      %p93 = por %p91, %p92
      %p95 = scmp.ne.s32.totalorder %s78, %s94
      %p96 = scmp.eq.s32.totalorder %s28, 0
      %p97 = por %p95, %p96
      %s98 = ssub.s32 %s29, %s41
      %s99 = ssub.s32 %s30, %s37
      %s100 = sor.u32 %s98, %s99
      %p101 = scmp.eq.s32.totalorder %s100, 0
      %s103 = sadd.s32 %s102, 1
      %s104 = scalar_select %p101, %s102, %s103
      %p107 = pneg %p101
      %p108 = scmp.eq.s32.totalorder %s22, 1
      %p109 = por %p107, %p108
      %p110 = scmp.ne.s32.totalorder %s102, %s105
      %p111 = scmp.eq.s32.totalorder %s22, 0
      %p112 = por %p110, %p111
      %p113 = scmp.ne.s32.totalorder %s102, %s105
      %p114 = scmp.eq.s32.totalorder %s27, 1
      %p115 = por %p113, %p114
      %p116 = scmp.ne.s32.totalorder %s105, %s106
      %p117 = scmp.eq.s32.totalorder %s27, 0
      %p118 = por %p116, %p117
      %p119 = scmp.ne.s32.totalorder %s105, %s106
      %p120 = scmp.eq.s32.totalorder %s28, 1
      %p121 = por %p119, %p120
      %p123 = scmp.ne.s32.totalorder %s106, %s122
      %p124 = scmp.eq.s32.totalorder %s28, 0
      %p125 = por %p123, %p124
      %s126 = ssub.s32 %s29, %s41
      %s127 = ssub.s32 %s30, %s37
      %s128 = sor.u32 %s126, %s127
      %p129 = scmp.eq.s32.totalorder %s128, 0
      %s131 = sadd.s32 %s130, 1
      %s132 = scalar_select %p129, %s130, %s131
      %p135 = pneg %p129
      %p136 = scmp.eq.s32.totalorder %s22, 1
      %p137 = por %p135, %p136
      %p138 = scmp.ne.s32.totalorder %s130, %s133
      %p139 = scmp.eq.s32.totalorder %s22, 0
      %p140 = por %p138, %p139
      %p141 = scmp.ne.s32.totalorder %s130, %s133
      %p142 = scmp.eq.s32.totalorder %s27, 1
      %p143 = por %p141, %p142
      %p144 = scmp.ne.s32.totalorder %s133, %s134
      %p145 = scmp.eq.s32.totalorder %s27, 0
      %p146 = por %p144, %p145
      %p147 = scmp.ne.s32.totalorder %s133, %s134
      %p148 = scmp.eq.s32.totalorder %s28, 1
      %p149 = por %p147, %p148
      %p151 = scmp.ne.s32.totalorder %s134, %s150
      %p152 = scmp.eq.s32.totalorder %s28, 0
      %p153 = por %p151, %p152
      %p154 = scmp.le.s32.totalorder 1, %s22
      %p155 = scmp.lt.s32.totalorder %s22, 3
      %p156 = pnand %p154, %p155
      %p157 = pneg %p156
      // Predicated region
      $region9: #{tpu_custom_call.1} parent=5 // pred_check
        _
      $region10: #{tpu_custom_call.1} parent=5 // pred_check_branch
        %159 = sbr.rel (%p156) target = $region12
      $region11: #{tpu_custom_call.1} parent=5 // pred_region
        %s160 = ssub.s32 %s22, 1
      $region12: #{tpu_custom_call.1} parent=5 // pred_fallthru
        _
      %p161 = scmp.lt.s32.totalorder %s22, 2
      // Predicated region
      $region13: #{tpu_custom_call.1} parent=5 // pred_check
        %p162 = pneg %p161
      $region14: #{tpu_custom_call.1} parent=5 // pred_check_branch
        %164 = sbr.rel (%p162) target = $region16
      $region15: #{tpu_custom_call.1} parent=5 // pred_region
        // Predicated region
        $region17: #{tpu_custom_call.1} parent=15 // pred_check
          %p165 = pneg %p56
        $region18: #{tpu_custom_call.1} parent=15 // pred_check_branch
          %167 = sbr.rel (%p165) target = $region20
        $region19: #{tpu_custom_call.1} parent=15 // pred_region
          %s168 = sand.u32 %s46, 1
          %s169 = scalar_lea.sflag [#allocation3], %s168
          %s170 = sand.u32 %s46, 1
          %s171 = smul.addr %s170, 8
          %s172 = scalar_lea.vmem [#allocation2], %s171
          %174 = vsyncadd %s169, 0
          %s175 = smul.addr %s29, 4
          %s176 = sadd.s32 %s30, %s175
          %s177 = smul.addr %s176, 2
          %s178 = scalar_lea.hbm %s0, %s177
          %s179 = sshll.u32 %s178, 4
          %s180 = int_to_ptr.hbm [resolvable:$true] %s179
          %s181 = sshll.u32 %s172, 4
          %s182 = int_to_ptr.vmem [resolvable:$true] %s181
          %187 = dma.hbm_to_vmem [thread:$0]  %s180, 128, %s182, %s169, 32, 32, 2
        $region20: #{tpu_custom_call.1} parent=15 // pred_fallthru
          _
        // Predicated region
        $region21: #{tpu_custom_call.1} parent=15 // pred_check
          %p188 = pneg %p84
        $region22: #{tpu_custom_call.1} parent=15 // pred_check_branch
          %190 = sbr.rel (%p188) target = $region24
        $region23: #{tpu_custom_call.1} parent=15 // pred_region
          %s191 = sand.u32 %s74, 1
          %s192 = scalar_lea.sflag [#allocation6], %s191
          %s193 = sand.u32 %s74, 1
          %s194 = smul.addr %s193, 8
          %s195 = scalar_lea.vmem [#allocation5], %s194
          %197 = vsyncadd %s192, 0
          %s198 = smul.addr %s29, 4
          %s199 = sadd.s32 %s30, %s198
          %s200 = smul.addr %s199, 2
          %s201 = scalar_lea.hbm %s1, %s200
          %s202 = sshll.u32 %s201, 4
          %s203 = int_to_ptr.hbm [resolvable:$true] %s202
          %s204 = sshll.u32 %s195, 4
          %s205 = int_to_ptr.vmem [resolvable:$true] %s204
          %210 = dma.hbm_to_vmem [thread:$0]  %s203, 128, %s205, %s192, 32, 32, 2
        $region24: #{tpu_custom_call.1} parent=15 // pred_fallthru
          _
      $region16: #{tpu_custom_call.1} parent=5 // pred_fallthru
        _
      %p211 = scmp.le.s32.totalorder 1, %s22
      %p212 = scmp.lt.s32.totalorder %s22, 3
      %p213 = pnand %p211, %p212
      %p214 = pneg %p213
      // Predicated region
      $region25: #{tpu_custom_call.1} parent=5 // pred_check
        _
      $region26: #{tpu_custom_call.1} parent=5 // pred_check_branch
        %216 = sbr.rel (%p213) target = $region28
      $region27: #{tpu_custom_call.1} parent=5 // pred_region
        %s217 = ssub.s32 %s22, 1
        %s218 = sand.u32 %s49, 1
        %s219 = scalar_lea.sflag [#allocation3], %s218
        %s220 = sand.u32 %s49, 1
        %s221 = smul.addr %s220, 8
        %s222 = scalar_lea.vmem [#allocation2], %s221
        // Predicated region
        $region29: #{tpu_custom_call.1} parent=27 // pred_check
          %p223 = pneg %p62
        $region30: #{tpu_custom_call.1} parent=27 // pred_check_branch
          %225 = sbr.rel (%p223) target = $region32
        $region31: #{tpu_custom_call.1} parent=27 // pred_region
          %227 = dma.done %s219, 128
        $region32: #{tpu_custom_call.1} parent=27 // pred_fallthru
          _
        %s228 = sand.u32 %s77, 1
        %s229 = scalar_lea.sflag [#allocation6], %s228
        %s230 = sand.u32 %s77, 1
        %s231 = smul.addr %s230, 8
        %s232 = scalar_lea.vmem [#allocation5], %s231
        // Predicated region
        $region33: #{tpu_custom_call.1} parent=27 // pred_check
          %p233 = pneg %p90
        $region34: #{tpu_custom_call.1} parent=27 // pred_check_branch
          %235 = sbr.rel (%p233) target = $region36
        $region35: #{tpu_custom_call.1} parent=27 // pred_region
          %237 = dma.done %s229, 128
        $region36: #{tpu_custom_call.1} parent=27 // pred_fallthru
          _
        %s238 = sand.u32 %s49, 1
        %s239 = scalar_lea.sflag [#allocation3], %s238
        %s240 = sand.u32 %s49, 1
        %s241 = smul.addr %s240, 8
        %s242 = scalar_lea.vmem [#allocation2], %s241
        %p243 = pneg %p62
        %p244 = pneg %p59
        %s245 = sand.u32 %s77, 1
        %s246 = scalar_lea.sflag [#allocation6], %s245
        %s247 = sand.u32 %s77, 1
        %s248 = smul.addr %s247, 8
        %s249 = scalar_lea.vmem [#allocation5], %s248
        %p250 = pneg %p90
        %p251 = pneg %p87
        %p252 = pneg %p118
        %p253 = pneg %p115
        %s254 = sand.u32 %s105, 1
        %s255 = scalar_lea.sflag [#allocation4], %s254
        %s256 = sand.u32 %s105, 1
        %s257 = smul.addr %s256, 2
        %s258 = scalar_lea.vmem [#allocation7], %s257
        %p259 = pneg %p146
        %p260 = pneg %p143
        %s261 = sand.u32 %s133, 1
        %s262 = scalar_lea.sflag [#allocation9], %s261
        %s263 = sand.u32 %s133, 1
        %s264 = smul.addr %s263, 2
        %s265 = scalar_lea.vmem [#allocation8], %s264
        %v266 = vld [vmem:[%s222] sm:$0x3]
        %v267 = vld [vmem:[%s222 + $0x2] sm:$0x3]
        %v268 = vld [vmem:[%s222 + $0x4] sm:$0x3]
        %v269 = vld [vmem:[%s222 + $0x6] sm:$0x3]
        %v270 = vld [vmem:[%s232] sm:$0x3]
        %v271 = vld [vmem:[%s232 + $0x2] sm:$0x3]
        %v272 = vld [vmem:[%s232 + $0x4] sm:$0x3]
        %v273 = vld [vmem:[%s232 + $0x6] sm:$0x3]
        %v274 = vsub.f32 %v266, %v270
        %v275 = vsub.f32 %v267, %v271
        %v276 = vsub.f32 %v268, %v272
        %v277 = vsub.f32 %v269, %v273
        %v278 = vmul.f32 %v274, %v274
        %v279 = vmul.f32 %v275, %v275
        %v280 = vmul.f32 %v276, %v276
        %v281 = vmul.f32 %v277, %v277
        %vm282 = vcmask 1041408
        %v283 = vsel %vm282, %v278, 0.0
        %v284 = vsel %vm282, %v279, 0.0
        %v285 = vadd.f32 %v283, %v284
        %v286 = vsel %vm282, %v280, 0.0
        %v287 = vadd.f32 %v285, %v286
        %v288 = vsel %vm282, %v281, 0.0
        %v289 = vadd.f32 %v287, %v288
        %v290 = vmul.f32 %v289, %v289
        %291 = vst [vmem:[%s258] sm:$0x3] %v289
        %292 = vst [vmem:[%s265] sm:$0x3] %v290
        %s293 = sand.u32 %s105, 1
        %s294 = scalar_lea.sflag [#allocation4], %s293
        %s295 = sand.u32 %s105, 1
        %s296 = smul.addr %s295, 2
        %s297 = scalar_lea.vmem [#allocation7], %s296
        %s298 = sand.u32 %s133, 1
        %s299 = scalar_lea.sflag [#allocation9], %s298
        %s300 = sand.u32 %s133, 1
        %s301 = smul.addr %s300, 2
        %s302 = scalar_lea.vmem [#allocation8], %s301
        // Predicated region
        $region37: #{tpu_custom_call.1} parent=27 // pred_check
          %p303 = pneg %p115
        $region38: #{tpu_custom_call.1} parent=27 // pred_check_branch
          %305 = sbr.rel (%p303) target = $region40
        $region39: #{tpu_custom_call.1} parent=27 // pred_region
          %307 = vsyncadd %s294, 0
          %s308 = sadd.s32 %s32, %s31
          %s309 = smul.addr %s308, 2
          %s310 = scalar_lea.hbm %s2, %s309
          %s312 = sshll.u32 %s297, 4
          %s313 = int_to_ptr.vmem [resolvable:$true] %s312
          %s314 = sshll.u32 %s310, 4
          %s315 = int_to_ptr.hbm [resolvable:$true] %s314
          %317 = dma.vmem_to_hbm [thread:$0]  %s313, 32, %s315, %s294
        $region40: #{tpu_custom_call.1} parent=27 // pred_fallthru
          _
        // Predicated region
        $region41: #{tpu_custom_call.1} parent=27 // pred_check
          %p318 = pneg %p143
        $region42: #{tpu_custom_call.1} parent=27 // pred_check_branch
          %320 = sbr.rel (%p318) target = $region44
        $region43: #{tpu_custom_call.1} parent=27 // pred_region
          %322 = vsyncadd %s299, 0
          %s323 = sadd.s32 %s32, %s31
          %s324 = smul.addr %s323, 2
          %s325 = scalar_lea.hbm %s3, %s324
          %s327 = sshll.u32 %s302, 4
          %s328 = int_to_ptr.vmem [resolvable:$true] %s327
          %s329 = sshll.u32 %s325, 4
          %s330 = int_to_ptr.hbm [resolvable:$true] %s329
          %332 = dma.vmem_to_hbm [thread:$0]  %s328, 32, %s330, %s299
        $region44: #{tpu_custom_call.1} parent=27 // pred_fallthru
          _
      $region28: #{tpu_custom_call.1} parent=5 // pred_fallthru
        _
      %p333 = scmp.le.s32.totalorder 2, %s22
      // Predicated region
      $region45: #{tpu_custom_call.1} parent=5 // pred_check
        %p334 = pneg %p333
      $region46: #{tpu_custom_call.1} parent=5 // pred_check_branch
        %336 = sbr.rel (%p334) target = $region48
      $region47: #{tpu_custom_call.1} parent=5 // pred_region
        %s337 = ssub.s32 %s22, 2
        // Predicated region
        $region49: #{tpu_custom_call.1} parent=47 // pred_check
          %p338 = pneg %p121
        $region50: #{tpu_custom_call.1} parent=47 // pred_check_branch
          %340 = sbr.rel (%p338) target = $region52
        $region51: #{tpu_custom_call.1} parent=47 // pred_region
          %s341 = sand.u32 %s106, 1
          %s342 = scalar_lea.sflag [#allocation4], %s341
          %s343 = sand.u32 %s106, 1
          %s344 = smul.addr %s343, 2
          %s345 = scalar_lea.vmem [#allocation7], %s344
          %347 = dma.done %s342, 32
        $region52: #{tpu_custom_call.1} parent=47 // pred_fallthru
          _
        // Predicated region
        $region53: #{tpu_custom_call.1} parent=47 // pred_check
          %p348 = pneg %p149
        $region54: #{tpu_custom_call.1} parent=47 // pred_check_branch
          %350 = sbr.rel (%p348) target = $region56
        $region55: #{tpu_custom_call.1} parent=47 // pred_region
          %s351 = sand.u32 %s134, 1
          %s352 = scalar_lea.sflag [#allocation9], %s351
          %s353 = sand.u32 %s134, 1
          %s354 = smul.addr %s353, 2
          %s355 = scalar_lea.vmem [#allocation8], %s354
          %357 = dma.done %s352, 32
        $region56: #{tpu_custom_call.1} parent=47 // pred_fallthru
          _
      $region48: #{tpu_custom_call.1} parent=5 // pred_fallthru
        _
    $region6: #{tpu_custom_call.1} parent=1 // loop_footer
      %s26 = sadd.s32 1, %s22
    $region7: #{tpu_custom_call.1} parent=1 // loop_footer_branch
      %21 = sbr.rel target = $region3
    $region8: #{tpu_custom_call.1} parent=1 // loop_exit
      _
    %358 = vsyncpa [#allocation3], 1
    %s359 = scalar_lea.sflag [#allocation3], 1
    %360 = vsyncpa %s359, 1
    %361 = vsyncpa [#allocation6], 1
    %s362 = scalar_lea.sflag [#allocation6], 1
    %363 = vsyncpa %s362, 1
    %364 = vsyncpa [#allocation4], 1
    %s365 = scalar_lea.sflag [#allocation4], 1
    %366 = vsyncpa %s365, 1
    %367 = vsyncpa [#allocation9], 1
    %s368 = scalar_lea.sflag [#allocation9], 1
    %369 = vsyncpa %s368, 1

</llo_original>
